<compile_context>
chip_gen: v7x
topology: tpu7x:2x2x1
jax: 0.10.0
libtpu: 0.0.40
codegen_flags: <defaults>
</compile_context>

<pallas_src>
import jax
import jax.numpy as jnp
from jax.experimental import pallas as pl
from jax.experimental.pallas import tpu as pltpu


def _make_kernel(C, use_mxu):
    """Build the fused kernel body; `use_mxu` is a trace-time choice."""

    def mix(w, b, a):
        # w: (C_out, C_in), b: (C_out, 1), a: (C_in, tl)  -> relu(w @ a + b)
        if use_mxu:
            z = jnp.dot(w, a, preferred_element_type=jnp.float32)
        else:
            # Small C: C*C broadcast multiply-adds on the VPU (MXU would be
            # <1% utilized and adds push/pop latency per tile).
            z = w[:, 0:1] * a[0:1, :]
            for ci in range(1, C):
                z = z + w[:, ci:ci + 1] * a[ci:ci + 1, :]
        return jnp.maximum(z + b, 0.0)

    def kernel(x_ref, y_ref, w1_ref, b1_ref, w2_ref, b2_ref, o_ref):
        # x_ref / y_ref: (C, tl) lane-dense pixel tiles.
        x = x_ref[...].astype(jnp.float32)
        y = y_ref[...].astype(jnp.float32)

        z1 = mix(w1_ref[...], b1_ref[...], x)       # FC1: conv+bn(+relu)
        z2 = mix(w2_ref[...], b2_ref[...], y)       # FC2: conv+bn(+relu)

        g = jax.nn.sigmoid(z1 + z2)                 # gate (exp on EUP slot)
        # z2 + g*(z1 - z2) == g*z1 + (1-g)*z2, one fewer VPU mul.
        o_ref[...] = (z2 + g * (z1 - z2)).astype(o_ref.dtype)

    return kernel


def gated_fusion(x_nchw, y_nchw, params, *, tl=512, io_dtype=None):
    """x_nchw, y_nchw: (N, C, H, W). params: folded conv+BN weights.

    io_dtype: optionally cast the streamed inputs (e.g. jnp.bfloat16 on
    v6e/v7x) to halve HBM traffic; math stays f32, output keeps input dtype.
    """
    N, C, H, W = x_nchw.shape
    L = H * W

    # Free reshapes -- no transpose, no pad.
    x = x_nchw.reshape(N, C, L)
    y = y_nchw.reshape(N, C, L)
    if io_dtype is not None:
        x = x.astype(io_dtype)
        y = y.astype(io_dtype)

    # Pixel-tile width: as large as reasonable, lane-aligned (multiple of 128),
    # never wider than the (rounded-up) pixel extent.
    if L <= 128:
        tl_eff = L                                   # full-extent block
    else:
        l_ceil = ((L + 127) // 128) * 128
        tl_eff = min(max(128, (tl // 128) * 128), l_ceil)

    grid = (N, pl.cdiv(L, tl_eff))                   # both axes parallel
    use_mxu = C > 32

    px_spec = pl.BlockSpec((None, C, tl_eff), lambda n, l: (n, 0, l))
    w_spec = pl.BlockSpec((C, C), lambda n, l: (0, 0))
    b_spec = pl.BlockSpec((C, 1), lambda n, l: (0, 0))

    out = pl.pallas_call(
        _make_kernel(C, use_mxu),
        out_shape=jax.ShapeDtypeStruct((N, C, L), x_nchw.dtype),
        grid_spec=pltpu.PrefetchScalarGridSpec(
            num_scalar_prefetch=0,
            grid=grid,
            in_specs=[px_spec, px_spec, w_spec, b_spec, w_spec, b_spec],
            out_specs=px_spec,
        ),
        compiler_params=pltpu.CompilerParams(
            dimension_semantics=("parallel", "parallel")),
    )(x, y, params["w1"], params["b1"], params["w2"], params["b2"])

    return out.reshape(N, C, H, W)


def make_params(key, dims, eps=1e-5):
    """Deterministic Conv2d(1x1) + BatchNorm2d init for both FC branches,
    with BN (eval mode) folded into the conv weight/bias.

    Kernel computes z = W_eff @ x + b_eff over (C, pixels) tiles, so:
      W_eff[o, i] = scale[o] * W_conv[o, i],  b_eff[o] = b_conv[o]*scale[o]+shift[o]
    """
    keys = jax.random.split(key, 12)

    def branch(ks):
        w_conv = jax.random.normal(ks[0], (dims, dims), jnp.float32) * 0.2
        b_conv = jax.random.normal(ks[1], (dims,), jnp.float32) * 0.1
        gamma = 1.0 + 0.1 * jax.random.normal(ks[2], (dims,), jnp.float32)
        beta = 0.1 * jax.random.normal(ks[3], (dims,), jnp.float32)
        run_mean = 0.1 * jax.random.normal(ks[4], (dims,), jnp.float32)
        run_var = 1.0 + 0.1 * jax.random.uniform(ks[5], (dims,), jnp.float32)

        scale = gamma / jnp.sqrt(run_var + eps)          # per output channel
        shift = beta - run_mean * scale
        w_eff = w_conv * scale[:, None]                  # (C_out, C_in)
        b_eff = (b_conv * scale + shift)[:, None]        # (C_out, 1)
        return w_eff, b_eff

    w1, b1 = branch(keys[0:6])
    w2, b2 = branch(keys[6:12])
    return {"w1": w1, "b1": b1, "w2": w2, "b2": b2}


def gated_fusion_ref(x, y, params):
    """Pure-JAX reference for correctness checking."""
    N, C, H, W = x.shape

    def fc(a, w, b):
        a = a.reshape(N, C, H * W)
        z = jnp.einsum("oc,ncl->nol", w, a) + b[None]
        return jnp.maximum(z, 0.0)

    z1 = fc(x, params["w1"], params["b1"])
    z2 = fc(y, params["w2"], params["b2"])
    g = jax.nn.sigmoid(z1 + z2)
    out = g * z1 + (1.0 - g) * z2
    return out.reshape(N, C, H, W)


if __name__ == "__main__":
    key = jax.random.PRNGKey(0)
    k_x, k_y, k_p = jax.random.split(key, 3)

    N, C, H, W = 2, 4, 16, 16
    x = jax.random.normal(k_x, (N, C, H, W), jnp.float32)
    y = jax.random.normal(k_y, (N, C, H, W), jnp.float32)
    params = make_params(k_p, C)

    out = gated_fusion(x, y, params)
    out = jax.block_until_ready(out)

    ref = gated_fusion_ref(x, y, params)
    assert out.shape == (N, C, H, W)
    assert jnp.allclose(out, ref, atol=1e-5, rtol=1e-5), "mismatch vs reference"

    print("KERNEL_OK")
</pallas_src>

<mosaic_0001>
module attributes {stable_mosaic.version = 11 : i64} {
  func.func @kernel(%arg0: i32, %arg1: i32, %arg2: memref<1x4x256xf32, #tpu.memory_space<vmem>>, %arg3: memref<1x4x256xf32, #tpu.memory_space<vmem>>, %arg4: memref<4x4xf32, #tpu.memory_space<vmem>>, %arg5: memref<4x1xf32, #tpu.memory_space<vmem>>, %arg6: memref<4x4xf32, #tpu.memory_space<vmem>>, %arg7: memref<4x1xf32, #tpu.memory_space<vmem>>, %arg8: memref<1x4x256xf32, #tpu.memory_space<vmem>>) attributes {dimension_semantics = [#tpu.dimension_semantics<parallel>, #tpu.dimension_semantics<parallel>], iteration_bounds = array<i64: 2, 1>, scalar_prefetch = 0 : i64, scratch_operands = 0 : i64, tpu.core_type = #tpu.core_type<tc>, window_params = [{transform_indices = @transform_0, window_bounds = array<i64: 1, 4, 256>}, {transform_indices = @transform_1, window_bounds = array<i64: 1, 4, 256>}, {pipeline_mode = #tpu.pipeline_mode<synchronous>, transform_indices = @transform_2, window_bounds = array<i64: 4, 4>}, {pipeline_mode = #tpu.pipeline_mode<synchronous>, transform_indices = @transform_3, window_bounds = array<i64: 4, 1>}, {pipeline_mode = #tpu.pipeline_mode<synchronous>, transform_indices = @transform_4, window_bounds = array<i64: 4, 4>}, {pipeline_mode = #tpu.pipeline_mode<synchronous>, transform_indices = @transform_5, window_bounds = array<i64: 4, 1>}, {transform_indices = @transform_6, window_bounds = array<i64: 1, 4, 256>}]} {
    %c0 = arith.constant 0 : index
    %c0_0 = arith.constant 0 : index
    %c0_1 = arith.constant 0 : index
    %0 = vector.load %arg2[%c0, %c0_0, %c0_1] : memref<1x4x256xf32, #tpu.memory_space<vmem>>, vector<1x4x256xf32>
    %1 = vector.shape_cast %0 : vector<1x4x256xf32> to vector<4x256xf32>
    %c0_2 = arith.constant 0 : index
    %c0_3 = arith.constant 0 : index
    %c0_4 = arith.constant 0 : index
    %2 = vector.load %arg3[%c0_2, %c0_3, %c0_4] : memref<1x4x256xf32, #tpu.memory_space<vmem>>, vector<1x4x256xf32>
    %3 = vector.shape_cast %2 : vector<1x4x256xf32> to vector<4x256xf32>
    %c0_5 = arith.constant 0 : index
    %c0_6 = arith.constant 0 : index
    %4 = vector.load %arg4[%c0_5, %c0_6] : memref<4x4xf32, #tpu.memory_space<vmem>>, vector<4x4xf32>
    %c0_7 = arith.constant 0 : index
    %c0_8 = arith.constant 0 : index
    %5 = vector.load %arg5[%c0_7, %c0_8] : memref<4x1xf32, #tpu.memory_space<vmem>>, vector<4x1xf32>
    %6 = vector.extract_strided_slice %4 {offsets = [0, 0], sizes = [4, 1], strides = [1, 1]} : vector<4x4xf32> to vector<4x1xf32>
    %7 = vector.extract_strided_slice %1 {offsets = [0, 0], sizes = [1, 256], strides = [1, 1]} : vector<4x256xf32> to vector<1x256xf32>
    %8 = vector.broadcast %6 : vector<4x1xf32> to vector<4x256xf32>
    %9 = vector.broadcast %7 : vector<1x256xf32> to vector<4x256xf32>
    %10 = arith.mulf %8, %9 : vector<4x256xf32>
    %11 = vector.extract_strided_slice %4 {offsets = [0, 1], sizes = [4, 1], strides = [1, 1]} : vector<4x4xf32> to vector<4x1xf32>
    %12 = vector.extract_strided_slice %1 {offsets = [1, 0], sizes = [1, 256], strides = [1, 1]} : vector<4x256xf32> to vector<1x256xf32>
    %13 = vector.broadcast %11 : vector<4x1xf32> to vector<4x256xf32>
    %14 = vector.broadcast %12 : vector<1x256xf32> to vector<4x256xf32>
    %15 = arith.mulf %13, %14 : vector<4x256xf32>
    %16 = arith.addf %10, %15 : vector<4x256xf32>
    %17 = vector.extract_strided_slice %4 {offsets = [0, 2], sizes = [4, 1], strides = [1, 1]} : vector<4x4xf32> to vector<4x1xf32>
    %18 = vector.extract_strided_slice %1 {offsets = [2, 0], sizes = [1, 256], strides = [1, 1]} : vector<4x256xf32> to vector<1x256xf32>
    %19 = vector.broadcast %17 : vector<4x1xf32> to vector<4x256xf32>
    %20 = vector.broadcast %18 : vector<1x256xf32> to vector<4x256xf32>
    %21 = arith.mulf %19, %20 : vector<4x256xf32>
    %22 = arith.addf %16, %21 : vector<4x256xf32>
    %23 = vector.extract_strided_slice %4 {offsets = [0, 3], sizes = [4, 1], strides = [1, 1]} : vector<4x4xf32> to vector<4x1xf32>
    %24 = vector.extract_strided_slice %1 {offsets = [3, 0], sizes = [1, 256], strides = [1, 1]} : vector<4x256xf32> to vector<1x256xf32>
    %25 = vector.broadcast %23 : vector<4x1xf32> to vector<4x256xf32>
    %26 = vector.broadcast %24 : vector<1x256xf32> to vector<4x256xf32>
    %27 = arith.mulf %25, %26 : vector<4x256xf32>
    %28 = arith.addf %22, %27 : vector<4x256xf32>
    %29 = vector.broadcast %5 : vector<4x1xf32> to vector<4x256xf32>
    %30 = arith.addf %28, %29 : vector<4x256xf32>
    %cst = arith.constant 0.000000e+00 : f32
    %31 = vector.broadcast %cst : f32 to vector<4x256xf32>
    %32 = arith.maximumf %30, %31 : vector<4x256xf32>
    %c0_9 = arith.constant 0 : index
    %c0_10 = arith.constant 0 : index
    %33 = vector.load %arg6[%c0_9, %c0_10] : memref<4x4xf32, #tpu.memory_space<vmem>>, vector<4x4xf32>
    %c0_11 = arith.constant 0 : index
    %c0_12 = arith.constant 0 : index
    %34 = vector.load %arg7[%c0_11, %c0_12] : memref<4x1xf32, #tpu.memory_space<vmem>>, vector<4x1xf32>
    %35 = vector.extract_strided_slice %33 {offsets = [0, 0], sizes = [4, 1], strides = [1, 1]} : vector<4x4xf32> to vector<4x1xf32>
    %36 = vector.extract_strided_slice %3 {offsets = [0, 0], sizes = [1, 256], strides = [1, 1]} : vector<4x256xf32> to vector<1x256xf32>
    %37 = vector.broadcast %35 : vector<4x1xf32> to vector<4x256xf32>
    %38 = vector.broadcast %36 : vector<1x256xf32> to vector<4x256xf32>
    %39 = arith.mulf %37, %38 : vector<4x256xf32>
    %40 = vector.extract_strided_slice %33 {offsets = [0, 1], sizes = [4, 1], strides = [1, 1]} : vector<4x4xf32> to vector<4x1xf32>
    %41 = vector.extract_strided_slice %3 {offsets = [1, 0], sizes = [1, 256], strides = [1, 1]} : vector<4x256xf32> to vector<1x256xf32>
    %42 = vector.broadcast %40 : vector<4x1xf32> to vector<4x256xf32>
    %43 = vector.broadcast %41 : vector<1x256xf32> to vector<4x256xf32>
    %44 = arith.mulf %42, %43 : vector<4x256xf32>
    %45 = arith.addf %39, %44 : vector<4x256xf32>
    %46 = vector.extract_strided_slice %33 {offsets = [0, 2], sizes = [4, 1], strides = [1, 1]} : vector<4x4xf32> to vector<4x1xf32>
    %47 = vector.extract_strided_slice %3 {offsets = [2, 0], sizes = [1, 256], strides = [1, 1]} : vector<4x256xf32> to vector<1x256xf32>
    %48 = vector.broadcast %46 : vector<4x1xf32> to vector<4x256xf32>
    %49 = vector.broadcast %47 : vector<1x256xf32> to vector<4x256xf32>
    %50 = arith.mulf %48, %49 : vector<4x256xf32>
    %51 = arith.addf %45, %50 : vector<4x256xf32>
    %52 = vector.extract_strided_slice %33 {offsets = [0, 3], sizes = [4, 1], strides = [1, 1]} : vector<4x4xf32> to vector<4x1xf32>
    %53 = vector.extract_strided_slice %3 {offsets = [3, 0], sizes = [1, 256], strides = [1, 1]} : vector<4x256xf32> to vector<1x256xf32>
    %54 = vector.broadcast %52 : vector<4x1xf32> to vector<4x256xf32>
    %55 = vector.broadcast %53 : vector<1x256xf32> to vector<4x256xf32>
    %56 = arith.mulf %54, %55 : vector<4x256xf32>
    %57 = arith.addf %51, %56 : vector<4x256xf32>
    %58 = vector.broadcast %34 : vector<4x1xf32> to vector<4x256xf32>
    %59 = arith.addf %57, %58 : vector<4x256xf32>
    %cst_13 = arith.constant 0.000000e+00 : f32
    %60 = vector.broadcast %cst_13 : f32 to vector<4x256xf32>
    %61 = arith.maximumf %59, %60 : vector<4x256xf32>
    %62 = arith.addf %32, %61 : vector<4x256xf32>
    %63 = arith.negf %62 : vector<4x256xf32>
    %64 = math.exp %63 : vector<4x256xf32>
    %cst_14 = arith.constant 1.000000e+00 : f32
    %65 = vector.broadcast %cst_14 : f32 to vector<4x256xf32>
    %66 = arith.addf %65, %64 : vector<4x256xf32>
    %67 = arith.divf %65, %66 : vector<4x256xf32>
    %68 = arith.subf %32, %61 : vector<4x256xf32>
    %69 = arith.mulf %67, %68 : vector<4x256xf32>
    %70 = arith.addf %61, %69 : vector<4x256xf32>
    %c0_15 = arith.constant 0 : index
    %c0_16 = arith.constant 0 : index
    %c0_17 = arith.constant 0 : index
    %71 = vector.load %arg8[%c0_15, %c0_16, %c0_17] : memref<1x4x256xf32, #tpu.memory_space<vmem>>, vector<1x4x256xf32>
    %72 = vector.shape_cast %71 : vector<1x4x256xf32> to vector<4x256xf32>
    %73 = vector.shape_cast %70 : vector<4x256xf32> to vector<1x4x256xf32>
    tpu.vector_store %arg8[%c0_15, %c0_16, %c0_17], %73 {strides = array<i32>} : memref<1x4x256xf32, #tpu.memory_space<vmem>>, vector<1x4x256xf32>,
    return
  }
  func.func @transform_0(%arg0: i32, %arg1: i32) -> (i32, i32, i32) {
    %c0_i32 = arith.constant 0 : i32
    %c0_i32_0 = arith.constant 0 : i32
    return %arg0, %c0_i32, %arg1 : i32, i32, i32
  }
  func.func @transform_1(%arg0: i32, %arg1: i32) -> (i32, i32, i32) {
    %c0_i32 = arith.constant 0 : i32
    %c0_i32_0 = arith.constant 0 : i32
    return %arg0, %c0_i32, %arg1 : i32, i32, i32
  }
  func.func @transform_2(%arg0: i32, %arg1: i32) -> (i32, i32) {
    %c0_i32 = arith.constant 0 : i32
    %c0_i32_0 = arith.constant 0 : i32
    %c0_i32_1 = arith.constant 0 : i32
    return %c0_i32, %c0_i32_0 : i32, i32
  }
  func.func @transform_3(%arg0: i32, %arg1: i32) -> (i32, i32) {
    %c0_i32 = arith.constant 0 : i32
    %c0_i32_0 = arith.constant 0 : i32
    %c0_i32_1 = arith.constant 0 : i32
    return %c0_i32, %c0_i32_0 : i32, i32
  }
  func.func @transform_4(%arg0: i32, %arg1: i32) -> (i32, i32) {
    %c0_i32 = arith.constant 0 : i32
    %c0_i32_0 = arith.constant 0 : i32
    %c0_i32_1 = arith.constant 0 : i32
    return %c0_i32, %c0_i32_0 : i32, i32
  }
  func.func @transform_5(%arg0: i32, %arg1: i32) -> (i32, i32) {
    %c0_i32 = arith.constant 0 : i32
    %c0_i32_0 = arith.constant 0 : i32
    %c0_i32_1 = arith.constant 0 : i32
    return %c0_i32, %c0_i32_0 : i32, i32
  }
  func.func @transform_6(%arg0: i32, %arg1: i32) -> (i32, i32, i32) {
    %c0_i32 = arith.constant 0 : i32
    %c0_i32_0 = arith.constant 0 : i32
    return %arg0, %c0_i32, %arg1 : i32, i32, i32
  }
}

</mosaic_0001>

<llo_original>
// kernel: tpu_custom_call.1
$region0: #{tpu_custom_call.1}
  #allocation0 [shape = 'u32[]', space=smem, size = 0x4, offset = 0x4, fixed_abs, tag = 'smem constant byte address 0x4 - core index']
  #allocation1 [shape = 'u32[144,128]{1,0:T(1,128)}', space=vmem, size = 0x12000, scoped, tag = 'internal scratch']
  %s0 = inlined_call_operand.hbm [shape: f32[2,4,256], index: 0, kind: input, shape index: {}]
  %s1 = inlined_call_operand.hbm [shape: f32[2,4,256], index: 1, kind: input, shape index: {}]
  %s2 = inlined_call_operand.vmem [shape: f32[4,4], index: 2, kind: input, shape index: {}]
  %s3 = inlined_call_operand.vmem [shape: f32[4,1], index: 3, kind: input, shape index: {}]
  %s4 = inlined_call_operand.vmem [shape: f32[4,4], index: 4, kind: input, shape index: {}]
  %s5 = inlined_call_operand.vmem [shape: f32[4,1], index: 5, kind: input, shape index: {}]
  %s6 = inlined_call_operand.hbm [shape: f32[2,4,256], index: 6, kind: output, shape index: {}]
  %s7 = sld [smem:[#allocation0]]
  $region65: #{tpu_custom_call.1} parent=0
    _
  %s9 = ssub.s32 1, %s7
  %s10 = scalar_select 0, %s9, %s7
  $region1: #{tpu_custom_call.1} parent=0
    #allocation2 [shape = 'u8[8192]{0}', space=vmem, size = 0x2000, scoped, tag = 'input window, operand 0']
    #allocation3 [shape = 's32[2]{0}', space=sflag, size = 0x8, scoped, tag = 'scoped memory for tpu_custom_call.1']
    #allocation4 [shape = 's32[2]{0}', space=sflag, size = 0x8, scoped, tag = 'scoped memory for tpu_custom_call.1']
    #allocation5 [shape = 'u8[8192]{0}', space=vmem, size = 0x2000, scoped, tag = 'input window, operand 1']
    #allocation6 [shape = 's32[2]{0}', space=sflag, size = 0x8, scoped, tag = 'scoped memory for tpu_custom_call.1']
    #allocation7 [shape = 'u8[8192]{0}', space=vmem, size = 0x2000, scoped, tag = 'output window, operand 0']
    %11 = vsyncpa [#allocation3], 0
    %s12 = scalar_lea.sflag [#allocation3], 1
    %13 = vsyncpa %s12, 0
    %14 = vsyncpa [#allocation6], 0
    %s15 = scalar_lea.sflag [#allocation6], 1
    %16 = vsyncpa %s15, 0
    %17 = vsyncpa [#allocation4], 0
    %s18 = scalar_lea.sflag [#allocation4], 1
    %19 = vsyncpa %s18, 0
    loop: start=0, step=1, limit=4
    $region2: #{tpu_custom_call.1} parent=1 // loop_pre_header
      _
    $region3: #{tpu_custom_call.1} parent=1 // loop_header
      %s21 = sphi 0, %s25
      %p22 = scmp.ge.s32.totalorder %s21, 4
      %s28 = sphi 0, %s40
      %s29 = sphi 0, %s36
      %s30 = sphi 0, %s28
      %s31 = sphi 0, %s29
      %s32 = sphi 0, %s30
      %s33 = sphi 0, %s31
      %s45 = sphi 0, %s47
      %s48 = sphi 0, %s45
      %s49 = sphi 0, %s48
      %s65 = sphi 0, %s49
      %s73 = sphi 0, %s75
      %s76 = sphi 0, %s73
      %s77 = sphi 0, %s76
      %s93 = sphi 0, %s77
      %s97 = sphi 0, %s97
      %s99 = sphi 0, %s97
      %s100 = sphi 0, %s99
      %s114 = sphi 0, %s100
      %s118 = sphi 0, %s118
      %s120 = sphi 0, %s118
      %s121 = sphi 0, %s120
      %s135 = sphi 0, %s121
      %s139 = sphi 0, %s139
      %s141 = sphi 0, %s139
      %s142 = sphi 0, %s141
      %s156 = sphi 0, %s142
      %s160 = sphi 0, %s160
      %s162 = sphi 0, %s160
      %s163 = sphi 0, %s162
      %s177 = sphi 0, %s163
      %s185 = sphi 0, %s187
      %s188 = sphi 0, %s185
      %s189 = sphi 0, %s188
      %s205 = sphi 0, %s189
    $region4: #{tpu_custom_call.1} parent=1 // loop_header_branch
      %24 = sbr.rel (%p22) target = $region8
    $region5: #{tpu_custom_call.1} parent=1 // loop_body
      %s26 = ssub.s32 %s21, 1
      %s27 = ssub.s32 %s21, 2
      %s34 = sadd.s32 1, %s29
      %p35 = scmp.ge.s32.totalorder %s34, 1
      %s36 = scalar_select %p35, 0, %s34
      %s37 = sadd.s32 1, %s28
      %s38 = scalar_select %p35, %s37, %s28
      %p39 = scmp.ge.s32.totalorder %s38, 2
      %s40 = scalar_select %p39, 0, %s38
      %s41 = ssub.s32 %s28, %s40
      %s42 = ssub.s32 %s29, %s36
      %s43 = sor.u32 %s41, %s42
      %p44 = scmp.eq.s32.totalorder %s43, 0
      %s46 = sadd.s32 %s45, 1
      %s47 = scalar_select %p44, %s45, %s46
      %p50 = pneg %p44
      %p51 = scmp.eq.s32.totalorder %s21, 1
      %p52 = por %p50, %p51
      %p53 = scmp.ne.s32.totalorder %s45, %s48
      %p54 = scmp.eq.s32.totalorder %s21, 0
      %p55 = por %p53, %p54
      %p56 = scmp.ne.s32.totalorder %s45, %s48
      %p57 = scmp.eq.s32.totalorder %s26, 1
      %p58 = por %p56, %p57
      %p59 = scmp.ne.s32.totalorder %s48, %s49
      %p60 = scmp.eq.s32.totalorder %s26, 0
      %p61 = por %p59, %p60
      %p62 = scmp.ne.s32.totalorder %s48, %s49
      %p63 = scmp.eq.s32.totalorder %s27, 1
      %p64 = por %p62, %p63
      %p66 = scmp.ne.s32.totalorder %s49, %s65
      %p67 = scmp.eq.s32.totalorder %s27, 0
      %p68 = por %p66, %p67
      %s69 = ssub.s32 %s28, %s40
      %s70 = ssub.s32 %s29, %s36
      %s71 = sor.u32 %s69, %s70
      %p72 = scmp.eq.s32.totalorder %s71, 0
      %s74 = sadd.s32 %s73, 1
      %s75 = scalar_select %p72, %s73, %s74
      %p78 = pneg %p72
      %p79 = scmp.eq.s32.totalorder %s21, 1
      %p80 = por %p78, %p79
      %p81 = scmp.ne.s32.totalorder %s73, %s76
      %p82 = scmp.eq.s32.totalorder %s21, 0
      %p83 = por %p81, %p82
      %p84 = scmp.ne.s32.totalorder %s73, %s76
      %p85 = scmp.eq.s32.totalorder %s26, 1
      %p86 = por %p84, %p85
      %p87 = scmp.ne.s32.totalorder %s76, %s77
      %p88 = scmp.eq.s32.totalorder %s26, 0
      %p89 = por %p87, %p88
      %p90 = scmp.ne.s32.totalorder %s76, %s77
      %p91 = scmp.eq.s32.totalorder %s27, 1
      %p92 = por %p90, %p91
      %p94 = scmp.ne.s32.totalorder %s77, %s93
      %p95 = scmp.eq.s32.totalorder %s27, 0
      %p96 = por %p94, %p95
      %s98 = sadd.s32 %s97, 1
      %p101 = scmp.eq.s32.totalorder %s21, 1
      %p102 = scmp.ne.s32.totalorder %s97, %s99
      %p103 = scmp.eq.s32.totalorder %s21, 0
      %p104 = por %p102, %p103
      %p105 = scmp.ne.s32.totalorder %s97, %s99
      %p106 = scmp.eq.s32.totalorder %s26, 1
      %p107 = por %p105, %p106
      %p108 = scmp.ne.s32.totalorder %s99, %s100
      %p109 = scmp.eq.s32.totalorder %s26, 0
      %p110 = por %p108, %p109
      %p111 = scmp.ne.s32.totalorder %s99, %s100
      %p112 = scmp.eq.s32.totalorder %s27, 1
      %p113 = por %p111, %p112
      %p115 = scmp.ne.s32.totalorder %s100, %s114
      %p116 = scmp.eq.s32.totalorder %s27, 0
      %p117 = por %p115, %p116
      %s119 = sadd.s32 %s118, 1
      %p122 = scmp.eq.s32.totalorder %s21, 1
      %p123 = scmp.ne.s32.totalorder %s118, %s120
      %p124 = scmp.eq.s32.totalorder %s21, 0
      %p125 = por %p123, %p124
      %p126 = scmp.ne.s32.totalorder %s118, %s120
      %p127 = scmp.eq.s32.totalorder %s26, 1
      %p128 = por %p126, %p127
      %p129 = scmp.ne.s32.totalorder %s120, %s121
      %p130 = scmp.eq.s32.totalorder %s26, 0
      %p131 = por %p129, %p130
      %p132 = scmp.ne.s32.totalorder %s120, %s121
      %p133 = scmp.eq.s32.totalorder %s27, 1
      %p134 = por %p132, %p133
      %p136 = scmp.ne.s32.totalorder %s121, %s135
      %p137 = scmp.eq.s32.totalorder %s27, 0
      %p138 = por %p136, %p137
      %s140 = sadd.s32 %s139, 1
      %p143 = scmp.eq.s32.totalorder %s21, 1
      %p144 = scmp.ne.s32.totalorder %s139, %s141
      %p145 = scmp.eq.s32.totalorder %s21, 0
      %p146 = por %p144, %p145
      %p147 = scmp.ne.s32.totalorder %s139, %s141
      %p148 = scmp.eq.s32.totalorder %s26, 1
      %p149 = por %p147, %p148
      %p150 = scmp.ne.s32.totalorder %s141, %s142
      %p151 = scmp.eq.s32.totalorder %s26, 0
      %p152 = por %p150, %p151
      %p153 = scmp.ne.s32.totalorder %s141, %s142
      %p154 = scmp.eq.s32.totalorder %s27, 1
      %p155 = por %p153, %p154
      %p157 = scmp.ne.s32.totalorder %s142, %s156
      %p158 = scmp.eq.s32.totalorder %s27, 0
      %p159 = por %p157, %p158
      %s161 = sadd.s32 %s160, 1
      %p164 = scmp.eq.s32.totalorder %s21, 1
      %p165 = scmp.ne.s32.totalorder %s160, %s162
      %p166 = scmp.eq.s32.totalorder %s21, 0
      %p167 = por %p165, %p166
      %p168 = scmp.ne.s32.totalorder %s160, %s162
      %p169 = scmp.eq.s32.totalorder %s26, 1
      %p170 = por %p168, %p169
      %p171 = scmp.ne.s32.totalorder %s162, %s163
      %p172 = scmp.eq.s32.totalorder %s26, 0
      %p173 = por %p171, %p172
      %p174 = scmp.ne.s32.totalorder %s162, %s163
      %p175 = scmp.eq.s32.totalorder %s27, 1
      %p176 = por %p174, %p175
      %p178 = scmp.ne.s32.totalorder %s163, %s177
      %p179 = scmp.eq.s32.totalorder %s27, 0
      %p180 = por %p178, %p179
      %s181 = ssub.s32 %s28, %s40
      %s182 = ssub.s32 %s29, %s36
      %s183 = sor.u32 %s181, %s182
      %p184 = scmp.eq.s32.totalorder %s183, 0
      %s186 = sadd.s32 %s185, 1
      %s187 = scalar_select %p184, %s185, %s186
      %p190 = pneg %p184
      %p191 = scmp.eq.s32.totalorder %s21, 1
      %p192 = por %p190, %p191
      %p193 = scmp.ne.s32.totalorder %s185, %s188
      %p194 = scmp.eq.s32.totalorder %s21, 0
      %p195 = por %p193, %p194
      %p196 = scmp.ne.s32.totalorder %s185, %s188
      %p197 = scmp.eq.s32.totalorder %s26, 1
      %p198 = por %p196, %p197
      %p199 = scmp.ne.s32.totalorder %s188, %s189
      %p200 = scmp.eq.s32.totalorder %s26, 0
      %p201 = por %p199, %p200
      %p202 = scmp.ne.s32.totalorder %s188, %s189
      %p203 = scmp.eq.s32.totalorder %s27, 1
      %p204 = por %p202, %p203
      %p206 = scmp.ne.s32.totalorder %s189, %s205
      %p207 = scmp.eq.s32.totalorder %s27, 0
      %p208 = por %p206, %p207
      %p209 = scmp.le.s32.totalorder 1, %s21
      %p210 = scmp.lt.s32.totalorder %s21, 3
      %p211 = pnand %p209, %p210
      %p212 = pneg %p211
      // Predicated region
      $region9: #{tpu_custom_call.1} parent=5 // pred_check
        _
      $region10: #{tpu_custom_call.1} parent=5 // pred_check_branch
        %214 = sbr.rel (%p211) target = $region12
      $region11: #{tpu_custom_call.1} parent=5 // pred_region
        %s215 = ssub.s32 %s21, 1
        // Predicated region
        $region13: #{tpu_custom_call.1} parent=11 // pred_check
          %p216 = pneg %p110
        $region14: #{tpu_custom_call.1} parent=11 // pred_check_branch
          %218 = sbr.rel (%p216) target = $region16
        $region15: #{tpu_custom_call.1} parent=11 // pred_region
          _
        $region16: #{tpu_custom_call.1} parent=11 // pred_fallthru
          _
        // Predicated region
        $region17: #{tpu_custom_call.1} parent=11 // pred_check
          %p219 = pneg %p131
        $region18: #{tpu_custom_call.1} parent=11 // pred_check_branch
          %221 = sbr.rel (%p219) target = $region20
        $region19: #{tpu_custom_call.1} parent=11 // pred_region
          _
        $region20: #{tpu_custom_call.1} parent=11 // pred_fallthru
          _
        // Predicated region
        $region21: #{tpu_custom_call.1} parent=11 // pred_check
          %p222 = pneg %p152
        $region22: #{tpu_custom_call.1} parent=11 // pred_check_branch
          %224 = sbr.rel (%p222) target = $region24
        $region23: #{tpu_custom_call.1} parent=11 // pred_region
          _
        $region24: #{tpu_custom_call.1} parent=11 // pred_fallthru
          _
        // Predicated region
        $region25: #{tpu_custom_call.1} parent=11 // pred_check
          %p225 = pneg %p173
        $region26: #{tpu_custom_call.1} parent=11 // pred_check_branch
          %227 = sbr.rel (%p225) target = $region28
        $region27: #{tpu_custom_call.1} parent=11 // pred_region
          _
        $region28: #{tpu_custom_call.1} parent=11 // pred_fallthru
          _
      $region12: #{tpu_custom_call.1} parent=5 // pred_fallthru
        _
      %p228 = scmp.lt.s32.totalorder %s21, 2
      // Predicated region
      $region29: #{tpu_custom_call.1} parent=5 // pred_check
        %p229 = pneg %p228
      $region30: #{tpu_custom_call.1} parent=5 // pred_check_branch
        %231 = sbr.rel (%p229) target = $region32
      $region31: #{tpu_custom_call.1} parent=5 // pred_region
        // Predicated region
        $region33: #{tpu_custom_call.1} parent=31 // pred_check
          %p232 = pneg %p55
        $region34: #{tpu_custom_call.1} parent=31 // pred_check_branch
          %234 = sbr.rel (%p232) target = $region36
        $region35: #{tpu_custom_call.1} parent=31 // pred_region
          %s235 = sand.u32 %s45, 1
          %s236 = scalar_lea.sflag [#allocation3], %s235
          %s237 = sand.u32 %s45, 1
          %s238 = smul.addr %s237, 8
          %s239 = scalar_lea.vmem [#allocation2], %s238
          %s240 = smul.u32 2, %s29
          %s242 = ssub.s32 128, 128
          %243 = vsyncadd %s236, %s242
          %s244 = smul.addr %s28, 2
          %s245 = sadd.s32 %s240, %s244
          %s246 = smul.addr %s245, 64
          %s247 = scalar_lea.hbm %s0, %s246
          %s249 = sshll.u32 %s239, 4
          %s250 = int_to_ptr.vmem [resolvable:$true] %s249
          %252 = dma.hbm_to_vmem [thread:$0]  %s247, 128, %s250, %s236
        $region36: #{tpu_custom_call.1} parent=31 // pred_fallthru
          _
        // Predicated region
        $region37: #{tpu_custom_call.1} parent=31 // pred_check
          %p253 = pneg %p83
        $region38: #{tpu_custom_call.1} parent=31 // pred_check_branch
          %255 = sbr.rel (%p253) target = $region40
        $region39: #{tpu_custom_call.1} parent=31 // pred_region
          %s256 = sand.u32 %s73, 1
          %s257 = scalar_lea.sflag [#allocation6], %s256
          %s258 = sand.u32 %s73, 1
          %s259 = smul.addr %s258, 8
          %s260 = scalar_lea.vmem [#allocation5], %s259
          %s261 = smul.u32 2, %s29
          %s263 = ssub.s32 128, 128
          %264 = vsyncadd %s257, %s263
          %s265 = smul.addr %s28, 2
          %s266 = sadd.s32 %s261, %s265
          %s267 = smul.addr %s266, 64
          %s268 = scalar_lea.hbm %s1, %s267
          %s270 = sshll.u32 %s260, 4
          %s271 = int_to_ptr.vmem [resolvable:$true] %s270
          %273 = dma.hbm_to_vmem [thread:$0]  %s268, 128, %s271, %s257
        $region40: #{tpu_custom_call.1} parent=31 // pred_fallthru
          _
      $region32: #{tpu_custom_call.1} parent=5 // pred_fallthru
        _
      %p274 = scmp.le.s32.totalorder 1, %s21
      %p275 = scmp.lt.s32.totalorder %s21, 3
      %p276 = pnand %p274, %p275
      %p277 = pneg %p276
      // Predicated region
      $region41: #{tpu_custom_call.1} parent=5 // pred_check
        _
      $region42: #{tpu_custom_call.1} parent=5 // pred_check_branch
        %279 = sbr.rel (%p276) target = $region44
      $region43: #{tpu_custom_call.1} parent=5 // pred_region
        %s280 = ssub.s32 %s21, 1
        %s281 = sand.u32 %s48, 1
        %s282 = scalar_lea.sflag [#allocation3], %s281
        %s283 = sand.u32 %s48, 1
        %s284 = smul.addr %s283, 8
        %s285 = scalar_lea.vmem [#allocation2], %s284
        // Predicated region
        $region45: #{tpu_custom_call.1} parent=43 // pred_check
          %p286 = pneg %p61
        $region46: #{tpu_custom_call.1} parent=43 // pred_check_branch
          %288 = sbr.rel (%p286) target = $region48
        $region47: #{tpu_custom_call.1} parent=43 // pred_region
          %289 = dma.done %s282, 128
        $region48: #{tpu_custom_call.1} parent=43 // pred_fallthru
          _
        %s290 = sand.u32 %s76, 1
        %s291 = scalar_lea.sflag [#allocation6], %s290
        %s292 = sand.u32 %s76, 1
        %s293 = smul.addr %s292, 8
        %s294 = scalar_lea.vmem [#allocation5], %s293
        // Predicated region
        $region49: #{tpu_custom_call.1} parent=43 // pred_check
          %p295 = pneg %p89
        $region50: #{tpu_custom_call.1} parent=43 // pred_check_branch
          %297 = sbr.rel (%p295) target = $region52
        $region51: #{tpu_custom_call.1} parent=43 // pred_region
          %298 = dma.done %s291, 128
        $region52: #{tpu_custom_call.1} parent=43 // pred_fallthru
          _
        %s299 = sand.u32 %s48, 1
        %s300 = scalar_lea.sflag [#allocation3], %s299
        %s301 = sand.u32 %s48, 1
        %s302 = smul.addr %s301, 8
        %s303 = scalar_lea.vmem [#allocation2], %s302
        %p304 = pneg %p61
        %p305 = pneg %p58
        %s306 = sand.u32 %s76, 1
        %s307 = scalar_lea.sflag [#allocation6], %s306
        %s308 = sand.u32 %s76, 1
        %s309 = smul.addr %s308, 8
        %s310 = scalar_lea.vmem [#allocation5], %s309
        %p311 = pneg %p89
        %p312 = pneg %p86
        %p313 = pneg %p110
        %p314 = pneg %p107
        %p315 = pneg %p131
        %p316 = pneg %p128
        %p317 = pneg %p152
        %p318 = pneg %p149
        %p319 = pneg %p173
        %p320 = pneg %p170
        %p321 = pneg %p201
        %p322 = pneg %p198
        %s323 = sand.u32 %s188, 1
        %s324 = scalar_lea.sflag [#allocation4], %s323
        %s325 = sand.u32 %s188, 1
        %s326 = smul.addr %s325, 8
        %s327 = scalar_lea.vmem [#allocation7], %s326
        %s328 = smul.u32 2, %s31
        %s329 = smul.u32 2, %s31
        %s330 = smul.u32 2, %s31
        %v331 = vld [vmem:[%s285] sm:$0xff]
        %v332 = vld [vmem:[%s294] sm:$0xff]
        %v333 = vld [vmem:[%s2] sm:$0xf]
        %v334 = vld [vmem:[%s3] sm:$0xf]
        %336 = vset.pattern.permute.xlu0 0
        %337 = vperm.xlu0 %336, %v333
        %v338 = vpop.permute.xlu0 %337
        %v341 = vlaneseq
        %v342 = vshrl.u32 %v341, 7
        %v343 = vsub.s32 0, %v342
        %v344 = vrot.slane %v331, %v343
        %v345 = vlaneseq
        %v346 = vshrl.u32 %v345, 7
        %v347 = vsub.s32 4, %v346
        %v348 = vrot.slane %v331, %v347
        %v351 = vlaneseq
        %v352 = vshrl.u32 %v351, 7
        %v353 = vsub.s32 0, %v352
        %v354 = vrot.slane %v344, %v353
        %v355 = vlaneseq
        %v356 = vshrl.u32 %v355, 7
        %v357 = vsub.s32 0, %v356
        %v358 = vrot.slane %v348, %v357
        %v359 = vmul.f32 %v338, %v354
        %v360 = vmul.f32 %v338, %v358
        %361 = vset.pattern.permute.xlu0 1
        %362 = vperm.xlu0 %361, %v333
        %v363 = vpop.permute.xlu0 %362
        %v365 = vlaneseq
        %v366 = vshrl.u32 %v365, 7
        %v367 = vsub.s32 1, %v366
        %v368 = vrot.slane %v331, %v367
        %v369 = vlaneseq
        %v370 = vshrl.u32 %v369, 7
        %v371 = vsub.s32 5, %v370
        %v372 = vrot.slane %v331, %v371
        %v375 = vlaneseq
        %v376 = vshrl.u32 %v375, 7
        %v377 = vsub.s32 1, %v376
        %v378 = vrot.slane %v368, %v377
        %v379 = vlaneseq
        %v380 = vshrl.u32 %v379, 7
        %v381 = vsub.s32 1, %v380
        %v382 = vrot.slane %v372, %v381
        %v383 = vmul.f32 %v363, %v378
        %v384 = vmul.f32 %v363, %v382
        %v385 = vadd.f32 %v359, %v383
        %v386 = vadd.f32 %v360, %v384
        %387 = vset.pattern.permute.xlu0 2
        %388 = vperm.xlu0 %387, %v333
        %v389 = vpop.permute.xlu0 %388
        %v391 = vlaneseq
        %v392 = vshrl.u32 %v391, 7
        %v393 = vsub.s32 2, %v392
        %v394 = vrot.slane %v331, %v393
        %v395 = vlaneseq
        %v396 = vshrl.u32 %v395, 7
        %v397 = vsub.s32 6, %v396
        %v398 = vrot.slane %v331, %v397
        %v401 = vlaneseq
        %v402 = vshrl.u32 %v401, 7
        %v403 = vsub.s32 2, %v402
        %v404 = vrot.slane %v394, %v403
        %v405 = vlaneseq
        %v406 = vshrl.u32 %v405, 7
        %v407 = vsub.s32 2, %v406
        %v408 = vrot.slane %v398, %v407
        %v409 = vmul.f32 %v389, %v404
        %v410 = vmul.f32 %v389, %v408
        %v411 = vadd.f32 %v385, %v409
        %v412 = vadd.f32 %v386, %v410
        %413 = vset.pattern.permute.xlu0 3
        %414 = vperm.xlu0 %413, %v333
        %v415 = vpop.permute.xlu0 %414
        %v417 = vlaneseq
        %v418 = vshrl.u32 %v417, 7
        %v419 = vsub.s32 3, %v418
        %v420 = vrot.slane %v331, %v419
        %v421 = vlaneseq
        %v422 = vshrl.u32 %v421, 7
        %v423 = vsub.s32 7, %v422
        %v424 = vrot.slane %v331, %v423
        %v427 = vlaneseq
        %v428 = vshrl.u32 %v427, 7
        %v429 = vsub.s32 3, %v428
        %v430 = vrot.slane %v420, %v429
        %v431 = vlaneseq
        %v432 = vshrl.u32 %v431, 7
        %v433 = vsub.s32 3, %v432
        %v434 = vrot.slane %v424, %v433
        %v435 = vmul.f32 %v415, %v430
        %v436 = vmul.f32 %v415, %v434
        %v437 = vadd.f32 %v411, %v435
        %v438 = vadd.f32 %v412, %v436
        %440 = vset.pattern.permute.xlu0 0
        %441 = vperm.xlu0 %440, %v334
        %v442 = vpop.permute.xlu0 %441
        %v444 = vadd.f32 %v437, %v442
        %v445 = vadd.f32 %v438, %v442
        %v446 = vmax.f32 %v444, 0.0
        %v447 = vmax.f32 %v445, 0.0
        %v448 = vld [vmem:[%s4] sm:$0xf]
        %v449 = vld [vmem:[%s5] sm:$0xf]
        %451 = vset.pattern.permute.xlu0 0
        %452 = vperm.xlu0 %451, %v448
        %v453 = vpop.permute.xlu0 %452
        %v456 = vlaneseq
        %v457 = vshrl.u32 %v456, 7
        %v458 = vsub.s32 0, %v457
        %v459 = vrot.slane %v332, %v458
        %v460 = vlaneseq
        %v461 = vshrl.u32 %v460, 7
        %v462 = vsub.s32 4, %v461
        %v463 = vrot.slane %v332, %v462
        %v466 = vlaneseq
        %v467 = vshrl.u32 %v466, 7
        %v468 = vsub.s32 0, %v467
        %v469 = vrot.slane %v459, %v468
        %v470 = vlaneseq
        %v471 = vshrl.u32 %v470, 7
        %v472 = vsub.s32 0, %v471
        %v473 = vrot.slane %v463, %v472
        %v474 = vmul.f32 %v453, %v469
        %v475 = vmul.f32 %v453, %v473
        %476 = vset.pattern.permute.xlu0 1
        %477 = vperm.xlu0 %476, %v448
        %v478 = vpop.permute.xlu0 %477
        %v480 = vlaneseq
        %v481 = vshrl.u32 %v480, 7
        %v482 = vsub.s32 1, %v481
        %v483 = vrot.slane %v332, %v482
        %v484 = vlaneseq
        %v485 = vshrl.u32 %v484, 7
        %v486 = vsub.s32 5, %v485
        %v487 = vrot.slane %v332, %v486
        %v490 = vlaneseq
        %v491 = vshrl.u32 %v490, 7
        %v492 = vsub.s32 1, %v491
        %v493 = vrot.slane %v483, %v492
        %v494 = vlaneseq
        %v495 = vshrl.u32 %v494, 7
        %v496 = vsub.s32 1, %v495
        %v497 = vrot.slane %v487, %v496
        %v498 = vmul.f32 %v478, %v493
        %v499 = vmul.f32 %v478, %v497
        %v500 = vadd.f32 %v474, %v498
        %v501 = vadd.f32 %v475, %v499
        %502 = vset.pattern.permute.xlu0 2
        %503 = vperm.xlu0 %502, %v448
        %v504 = vpop.permute.xlu0 %503
        %v506 = vlaneseq
        %v507 = vshrl.u32 %v506, 7
        %v508 = vsub.s32 2, %v507
        %v509 = vrot.slane %v332, %v508
        %v510 = vlaneseq
        %v511 = vshrl.u32 %v510, 7
        %v512 = vsub.s32 6, %v511
        %v513 = vrot.slane %v332, %v512
        %v516 = vlaneseq
        %v517 = vshrl.u32 %v516, 7
        %v518 = vsub.s32 2, %v517
        %v519 = vrot.slane %v509, %v518
        %v520 = vlaneseq
        %v521 = vshrl.u32 %v520, 7
        %v522 = vsub.s32 2, %v521
        %v523 = vrot.slane %v513, %v522
        %v524 = vmul.f32 %v504, %v519
        %v525 = vmul.f32 %v504, %v523
        %v526 = vadd.f32 %v500, %v524
        %v527 = vadd.f32 %v501, %v525
        %528 = vset.pattern.permute.xlu0 3
        %529 = vperm.xlu0 %528, %v448
        %v530 = vpop.permute.xlu0 %529
        %v532 = vlaneseq
        %v533 = vshrl.u32 %v532, 7
        %v534 = vsub.s32 3, %v533
        %v535 = vrot.slane %v332, %v534
        %v536 = vlaneseq
        %v537 = vshrl.u32 %v536, 7
        %v538 = vsub.s32 7, %v537
        %v539 = vrot.slane %v332, %v538
        %v542 = vlaneseq
        %v543 = vshrl.u32 %v542, 7
        %v544 = vsub.s32 3, %v543
        %v545 = vrot.slane %v535, %v544
        %v546 = vlaneseq
        %v547 = vshrl.u32 %v546, 7
        %v548 = vsub.s32 3, %v547
        %v549 = vrot.slane %v539, %v548
        %v550 = vmul.f32 %v530, %v545
        %v551 = vmul.f32 %v530, %v549
        %v552 = vadd.f32 %v526, %v550
        %v553 = vadd.f32 %v527, %v551
        %555 = vset.pattern.permute.xlu0 0
        %556 = vperm.xlu0 %555, %v449
        %v557 = vpop.permute.xlu0 %556
        %v559 = vadd.f32 %v552, %v557
        %v560 = vadd.f32 %v553, %v557
        %v561 = vmax.f32 %v559, 0.0
        %v562 = vmax.f32 %v560, 0.0
        %v563 = vadd.f32 %v446, %v561
        %v564 = vadd.f32 %v447, %v562
        %v565 = vxor.u32 %v563, 2147483648
        %v566 = vxor.u32 %v564, 2147483648
        %v567 = vmul.f32 %v565, 1.442695
        %v568 = vpow.pop %v567
        %v569 = vmul.f32 %v566, 1.442695
        %v570 = vpow.pop %v569
        %v571 = vadd.f32 %v568, 1.0
        %v572 = vadd.f32 %v570, 1.0
        %v573 = vrcp.pop %v571
        %v574 = vmul.f32 1.0, %v573
        %v575 = vrcp.pop %v572
        %v576 = vmul.f32 1.0, %v575
        %v577 = vsub.f32 %v446, %v561
        %v578 = vsub.f32 %v447, %v562
        %v579 = vmul.f32 %v574, %v577
        %v580 = vmul.f32 %v576, %v578
        %v581 = vadd.f32 %v561, %v579
        %v582 = vadd.f32 %v562, %v580
        %v585 = vcombine.low %v581, %v582
        %587 = vst [vmem:[%s327] sm:$0xff] %v585
        %s588 = sand.u32 %s188, 1
        %s589 = scalar_lea.sflag [#allocation4], %s588
        %s590 = sand.u32 %s188, 1
        %s591 = smul.addr %s590, 8
        %s592 = scalar_lea.vmem [#allocation7], %s591
        // Predicated region
        $region53: #{tpu_custom_call.1} parent=43 // pred_check
          %p593 = pneg %p198
        $region54: #{tpu_custom_call.1} parent=43 // pred_check_branch
          %595 = sbr.rel (%p593) target = $region56
        $region55: #{tpu_custom_call.1} parent=43 // pred_region
          %s596 = smul.u32 2, %s31
          %s598 = ssub.s32 128, 128
          %599 = vsyncadd %s589, %s598
          %s600 = smul.addr %s30, 2
          %s601 = sadd.s32 %s596, %s600
          %s602 = smul.addr %s601, 64
          %s603 = scalar_lea.hbm %s6, %s602
          %s605 = sshll.u32 %s592, 4
          %s606 = int_to_ptr.vmem [resolvable:$true] %s605
          %608 = dma.vmem_to_hbm [thread:$0]  %s606, 128, %s603, %s589
        $region56: #{tpu_custom_call.1} parent=43 // pred_fallthru
          _
      $region44: #{tpu_custom_call.1} parent=5 // pred_fallthru
        _
      %p609 = scmp.le.s32.totalorder 2, %s21
      // Predicated region
      $region57: #{tpu_custom_call.1} parent=5 // pred_check
        %p610 = pneg %p609
      $region58: #{tpu_custom_call.1} parent=5 // pred_check_branch
        %612 = sbr.rel (%p610) target = $region60
      $region59: #{tpu_custom_call.1} parent=5 // pred_region
        %s613 = ssub.s32 %s21, 2
        // Predicated region
        $region61: #{tpu_custom_call.1} parent=59 // pred_check
          %p614 = pneg %p204
        $region62: #{tpu_custom_call.1} parent=59 // pred_check_branch
          %616 = sbr.rel (%p614) target = $region64
        $region63: #{tpu_custom_call.1} parent=59 // pred_region
          %s617 = sand.u32 %s189, 1
          %s618 = scalar_lea.sflag [#allocation4], %s617
          %s619 = sand.u32 %s189, 1
          %s620 = smul.addr %s619, 8
          %s621 = scalar_lea.vmem [#allocation7], %s620
          %622 = dma.done %s618, 128
        $region64: #{tpu_custom_call.1} parent=59 // pred_fallthru
          _
      $region60: #{tpu_custom_call.1} parent=5 // pred_fallthru
        _
    $region6: #{tpu_custom_call.1} parent=1 // loop_footer
      %s25 = sadd.s32 1, %s21
    $region7: #{tpu_custom_call.1} parent=1 // loop_footer_branch
      %20 = sbr.rel target = $region3
    $region8: #{tpu_custom_call.1} parent=1 // loop_exit
      _
    %623 = vsyncpa [#allocation3], 1
    %s624 = scalar_lea.sflag [#allocation3], 1
    %625 = vsyncpa %s624, 1
    %626 = vsyncpa [#allocation6], 1
    %s627 = scalar_lea.sflag [#allocation6], 1
    %628 = vsyncpa %s627, 1
    %629 = vsyncpa [#allocation4], 1
    %s630 = scalar_lea.sflag [#allocation4], 1
    %631 = vsyncpa %s630, 1

</llo_original>
